<compile_context>
chip_gen: v5e
topology: v5e:2x2
jax: 0.10.0
libtpu: 0.0.40
codegen_flags: <defaults>
</compile_context>

<pallas_src>
import functools

import jax
import jax.numpy as jnp
from jax.experimental import pallas as pl
from jax.experimental.pallas import tpu as pltpu


def _round_up(x, m):
    return (x + m - 1) // m * m


def _loss_kernel_eig(truth_ref, pred_ref, keep_ref, eigens_ref, out_ref, *, alpha):
    d = (truth_ref[...].astype(jnp.float32)
         - pred_ref[...].astype(jnp.float32)) * keep_ref[...]
    tmp = d * d * (1.0 - alpha) + eigens_ref[...].astype(jnp.float32) * alpha
    out_ref[...] = jnp.full(out_ref.shape, jnp.sum(tmp), dtype=jnp.float32)


def _loss_kernel_noeig(truth_ref, pred_ref, keep_ref, out_ref):
    # alpha == 0.0  ->  tmp = differ**2
    d = (truth_ref[...].astype(jnp.float32)
         - pred_ref[...].astype(jnp.float32)) * keep_ref[...]
    out_ref[...] = jnp.full(out_ref.shape, jnp.sum(d * d), dtype=jnp.float32)


def _pad2(x, rows, cols):
    pr, pc = rows - x.shape[0], cols - x.shape[1]
    if pr == 0 and pc == 0:
        return x
    return jnp.pad(x, ((0, pr), (0, pc)))


def loss_mse_eigenvalues(truth, pred, mask, eigens, alpha=0.0):
    """Pallas equivalent of Loss_MSE_eigenvalues.forward. Returns a scalar f32."""
    B, T, C, H, W = truth.shape
    N = B * T
    D = C * H * W
    Dp = _round_up(D, 128)                 # lane-dense last dim
    alpha = float(alpha)
    use_eig = (alpha != 0.0)

    # Flatten (B,T)->N rows and (C,H,W)->D lanes.
    tr = truth.reshape(N, D)
    pr = pred.reshape(N, D)

    # Precompute keep mask once, broadcast over C, flattened & padded.
    keep = jnp.broadcast_to((mask != 0).astype(jnp.float32)[None, :, :],
                            (C, H, W)).reshape(1, D)

    # Rows per grid step: target ~1 MiB per input block (multiple of 8 rows).
    itemsize = jnp.dtype(truth.dtype).itemsize
    target_rows = max(8, ((1 << 20) // (Dp * itemsize)) // 8 * 8)
    TN = min(target_rows, _round_up(N, 8))
    Np = _round_up(N, TN)
    G = Np // TN

    # Zero padding contributes exactly 0 to the sum (differ=0, eigens pad=0).
    tr = _pad2(tr, Np, Dp)
    pr = _pad2(pr, Np, Dp)
    keep = _pad2(keep, 1, Dp)

    row_spec = pl.BlockSpec((TN, Dp), lambda i: (i, 0))
    keep_spec = pl.BlockSpec((1, Dp), lambda i: (0, 0))      # resident
    out_spec = pl.BlockSpec((1, 128), lambda i: (i, 0))      # lane-dense partials

    if use_eig:
        eg = _pad2(eigens.reshape(N, D), Np, Dp)
        kernel = functools.partial(_loss_kernel_eig, alpha=alpha)
        in_specs = [row_spec, row_spec, keep_spec, row_spec]
        args = (tr, pr, keep, eg)
    else:
        kernel = _loss_kernel_noeig
        in_specs = [row_spec, row_spec, keep_spec]
        args = (tr, pr, keep)

    partials = pl.pallas_call(
        kernel,
        out_shape=jax.ShapeDtypeStruct((G, 128), jnp.float32),
        grid_spec=pltpu.PrefetchScalarGridSpec(
            num_scalar_prefetch=0,
            grid=(G,),
            in_specs=in_specs,
            out_specs=out_spec,
        ),
        compiler_params=pltpu.CompilerParams(
            dimension_semantics=("parallel",),   # independent per-block partials
            vmem_limit_bytes=64 << 20,
        ),
    )(*args)

    # Final tiny reduction + mean over the ORIGINAL number of rows (B*T).
    return jnp.sum(partials[:, 0]) / jnp.float32(N)


def _reference(truth, pred, mask, eigens, alpha=0.0):
    keep = (mask != 0).astype(jnp.float32)
    differ = (truth - pred) * keep
    tmp = differ ** 2 * (1.0 - alpha) + eigens * alpha
    mse = jnp.sum(tmp, axis=(2, 3, 4))
    return jnp.mean(mse)


if __name__ == "__main__":
    key = jax.random.PRNGKey(0)
    k1, k2, k3, k4 = jax.random.split(key, 4)

    # Aligned case: C*H*W = 512 (multiple of 128).
    B, T, C, H, W = 2, 3, 4, 8, 16
    truth = jax.random.normal(k1, (B, T, C, H, W), dtype=jnp.float32)
    pred = jax.random.normal(k2, (B, T, C, H, W), dtype=jnp.float32)
    eigens = jax.random.normal(k3, (B, T, C, H, W), dtype=jnp.float32)
    mask = (jax.random.uniform(k4, (H, W)) > 0.3).astype(jnp.float32)

    # alpha = 0.0 (module default): eigens stream is skipped inside the kernel.
    out0 = jax.block_until_ready(loss_mse_eigenvalues(truth, pred, mask, eigens, 0.0))
    ref0 = _reference(truth, pred, mask, eigens, 0.0)
    assert jnp.allclose(out0, ref0, rtol=1e-5, atol=1e-5), (out0, ref0)

    # nonzero alpha exercises the eigens branch.
    out1 = jax.block_until_ready(loss_mse_eigenvalues(truth, pred, mask, eigens, 0.25))
    ref1 = _reference(truth, pred, mask, eigens, 0.25)
    assert jnp.allclose(out1, ref1, rtol=1e-5, atol=1e-5), (out1, ref1)

    # Unaligned case: D = 3*7*10 = 210 -> padded to 256 lanes; N = 10 -> padded rows.
    k5, k6, k7, k8 = jax.random.split(jax.random.PRNGKey(1), 4)
    B2, T2, C2, H2, W2 = 2, 5, 3, 7, 10
    truth2 = jax.random.normal(k5, (B2, T2, C2, H2, W2), dtype=jnp.float32)
    pred2 = jax.random.normal(k6, (B2, T2, C2, H2, W2), dtype=jnp.float32)
    eigens2 = jax.random.normal(k7, (B2, T2, C2, H2, W2), dtype=jnp.float32)
    mask2 = (jax.random.uniform(k8, (H2, W2)) > 0.3).astype(jnp.float32)

    out2 = jax.block_until_ready(loss_mse_eigenvalues(truth2, pred2, mask2, eigens2, 0.5))
    ref2 = _reference(truth2, pred2, mask2, eigens2, 0.5)
    assert jnp.allclose(out2, ref2, rtol=1e-5, atol=1e-5), (out2, ref2)

    print("KERNEL_OK")
</pallas_src>

<mosaic_0001>
module attributes {stable_mosaic.version = 11 : i64} {
  func.func @_loss_kernel_noeig(%arg0: i32, %arg1: memref<8x512xf32, #tpu.memory_space<vmem>>, %arg2: memref<8x512xf32, #tpu.memory_space<vmem>>, %arg3: memref<1x512xf32, #tpu.memory_space<vmem>>, %arg4: memref<1x128xf32, #tpu.memory_space<vmem>>) attributes {dimension_semantics = [#tpu.dimension_semantics<parallel>], iteration_bounds = array<i64: 1>, scalar_prefetch = 0 : i64, scratch_operands = 0 : i64, tpu.core_type = #tpu.core_type<tc>, window_params = [{transform_indices = @transform_0, window_bounds = array<i64: 8, 512>}, {transform_indices = @transform_1, window_bounds = array<i64: 8, 512>}, {pipeline_mode = #tpu.pipeline_mode<synchronous>, transform_indices = @transform_2, window_bounds = array<i64: 1, 512>}, {transform_indices = @transform_3, window_bounds = array<i64: 1, 128>}]} {
    %c0 = arith.constant 0 : index
    %c0_0 = arith.constant 0 : index
    %0 = vector.load %arg1[%c0, %c0_0] : memref<8x512xf32, #tpu.memory_space<vmem>>, vector<8x512xf32>
    %c0_1 = arith.constant 0 : index
    %c0_2 = arith.constant 0 : index
    %1 = vector.load %arg2[%c0_1, %c0_2] : memref<8x512xf32, #tpu.memory_space<vmem>>, vector<8x512xf32>
    %2 = arith.subf %0, %1 : vector<8x512xf32>
    %c0_3 = arith.constant 0 : index
    %c0_4 = arith.constant 0 : index
    %3 = vector.load %arg3[%c0_3, %c0_4] : memref<1x512xf32, #tpu.memory_space<vmem>>, vector<1x512xf32>
    %4 = vector.broadcast %3 : vector<1x512xf32> to vector<8x512xf32>
    %5 = arith.mulf %2, %4 : vector<8x512xf32>
    %6 = arith.mulf %5, %5 : vector<8x512xf32>
    %7 = vector.shape_cast %6 : vector<8x512xf32> to vector<1x8x512xf32>
    %cst = arith.constant dense<0.000000e+00> : vector<1xf32>
    %8 = vector.multi_reduction <add>, %7, %cst [1, 2] : vector<1x8x512xf32> to vector<1xf32>
    %9 = vector.shape_cast %8 : vector<1xf32> to vector<1x1x1xf32>
    %10 = vector.extract %9[0, 0, 0] : f32 from vector<1x1x1xf32>
    %11 = vector.broadcast %10 : f32 to vector<1x128xf32>
    %c0_5 = arith.constant 0 : index
    %c0_6 = arith.constant 0 : index
    %12 = vector.load %arg4[%c0_5, %c0_6] : memref<1x128xf32, #tpu.memory_space<vmem>>, vector<1x128xf32>
    tpu.vector_store %arg4[%c0_5, %c0_6], %11 {strides = array<i32>} : memref<1x128xf32, #tpu.memory_space<vmem>>, vector<1x128xf32>,
    return
  }
  func.func @transform_0(%arg0: i32) -> (i32, i32) {
    %c0_i32 = arith.constant 0 : i32
    %c0_i32_0 = arith.constant 0 : i32
    return %arg0, %c0_i32 : i32, i32
  }
  func.func @transform_1(%arg0: i32) -> (i32, i32) {
    %c0_i32 = arith.constant 0 : i32
    %c0_i32_0 = arith.constant 0 : i32
    return %arg0, %c0_i32 : i32, i32
  }
  func.func @transform_2(%arg0: i32) -> (i32, i32) {
    %c0_i32 = arith.constant 0 : i32
    %c0_i32_0 = arith.constant 0 : i32
    %c0_i32_1 = arith.constant 0 : i32
    return %c0_i32, %c0_i32_0 : i32, i32
  }
  func.func @transform_3(%arg0: i32) -> (i32, i32) {
    %c0_i32 = arith.constant 0 : i32
    %c0_i32_0 = arith.constant 0 : i32
    return %arg0, %c0_i32 : i32, i32
  }
}

</mosaic_0001>

<llo_original>
// kernel: tpu_custom_call.1
$region0: #{tpu_custom_call.1}
  #allocation0 [shape = 'u32[]', space=smem, size = 0x4, offset = 0x4, fixed_abs, tag = 'smem constant byte address 0x4 - core index']
  #allocation1 [shape = 'u32[72,128]{1,0:T(1,128)}', space=vmem, size = 0x9000, scoped, tag = 'internal scratch']
  %s0 = inlined_call_operand.hbm [shape: f32[8,512], index: 0, kind: input, shape index: {}]
  %s1 = inlined_call_operand.hbm [shape: f32[8,512], index: 1, kind: input, shape index: {}]
  %s2 = inlined_call_operand.hbm [shape: f32[1,512], index: 2, kind: input, shape index: {}]
  %s3 = inlined_call_operand.hbm [shape: f32[1,128], index: 3, kind: output, shape index: {}]
  %s4 = sld [smem:[#allocation0]]
  $region34: #{tpu_custom_call.1} parent=0
    _
  %s6 = ssub.s32 1, %s4
  %s7 = scalar_select 0, %s6, %s4
  $region1: #{tpu_custom_call.1} parent=0
    #allocation2 [shape = 'u8[16384]{0}', space=vmem, size = 0x4000, scoped, tag = 'input window, operand 0, single buffered']
    #allocation3 [shape = 's32[1]{0}', space=sflag, size = 0x4, scoped, tag = 'scoped memory for tpu_custom_call.1']
    #allocation4 [shape = 's32[1]{0}', space=sflag, size = 0x4, scoped, tag = 'scoped memory for tpu_custom_call.1']
    #allocation5 [shape = 'u8[16384]{0}', space=vmem, size = 0x4000, scoped, tag = 'input window, operand 1, single buffered']
    #allocation6 [shape = 's32[1]{0}', space=sflag, size = 0x4, scoped, tag = 'scoped memory for tpu_custom_call.1']
    #allocation7 [shape = 'u8[2048]{0}', space=vmem, size = 0x800, scoped, tag = 'input window, operand 2, single buffered']
    #allocation8 [shape = 'u8[512]{0}', space=vmem, size = 0x400, scoped, tag = 'output window, operand 0, single buffered']
    %8 = vsyncpa [#allocation3], 0
    %9 = vsyncpa [#allocation6], 0
    %10 = vsyncpa [#allocation4], 0
    // Predicated region
    $region2: #{tpu_custom_call.1} parent=1 // pred_check
      _
    $region3: #{tpu_custom_call.1} parent=1 // pred_check_branch
      %12 = sbr.rel (0) target = $region5
    $region4: #{tpu_custom_call.1} parent=1 // pred_region
      %14 = vsyncadd [#allocation3], 0
      %s16 = sshll.u32 %s0, 4
      %s17 = int_to_ptr.hbm [resolvable:$true] %s16
      %s18 = sshll.u32 [#allocation2], 4
      %s19 = int_to_ptr.vmem [resolvable:$true] %s18
      %21 = dma.hbm_to_vmem [thread:$0]  %s17, 512, %s19, [#allocation3]
    $region5: #{tpu_custom_call.1} parent=1 // pred_fallthru
      _
    // Predicated region
    $region6: #{tpu_custom_call.1} parent=1 // pred_check
      _
    $region7: #{tpu_custom_call.1} parent=1 // pred_check_branch
      %23 = sbr.rel (0) target = $region9
    $region8: #{tpu_custom_call.1} parent=1 // pred_region
      %25 = vsyncadd [#allocation6], 0
      %s27 = sshll.u32 %s1, 4
      %s28 = int_to_ptr.hbm [resolvable:$true] %s27
      %s29 = sshll.u32 [#allocation5], 4
      %s30 = int_to_ptr.vmem [resolvable:$true] %s29
      %32 = dma.hbm_to_vmem [thread:$0]  %s28, 512, %s30, [#allocation6]
    $region9: #{tpu_custom_call.1} parent=1 // pred_fallthru
      _
    // Predicated region
    $region10: #{tpu_custom_call.1} parent=1 // pred_check
      _
    $region11: #{tpu_custom_call.1} parent=1 // pred_check_branch
      %34 = sbr.rel (0) target = $region13
    $region12: #{tpu_custom_call.1} parent=1 // pred_region
      %36 = vsyncadd [#allocation6], 0
      %s38 = sshll.u32 %s2, 4
      %s39 = int_to_ptr.hbm [resolvable:$true] %s38
      %s40 = sshll.u32 [#allocation7], 4
      %s41 = int_to_ptr.vmem [resolvable:$true] %s40
      %43 = dma.hbm_to_vmem [thread:$0]  %s39, 64, %s41, [#allocation6]
    $region13: #{tpu_custom_call.1} parent=1 // pred_fallthru
      _
    // Predicated region
    $region14: #{tpu_custom_call.1} parent=1 // pred_check
      _
    $region15: #{tpu_custom_call.1} parent=1 // pred_check_branch
      %45 = sbr.rel (0) target = $region17
    $region16: #{tpu_custom_call.1} parent=1 // pred_region
      %47 = dma.done [#allocation3], 512
    $region17: #{tpu_custom_call.1} parent=1 // pred_fallthru
      _
    // Predicated region
    $region18: #{tpu_custom_call.1} parent=1 // pred_check
      _
    $region19: #{tpu_custom_call.1} parent=1 // pred_check_branch
      %49 = sbr.rel (0) target = $region21
    $region20: #{tpu_custom_call.1} parent=1 // pred_region
      %51 = dma.done [#allocation6], 512
    $region21: #{tpu_custom_call.1} parent=1 // pred_fallthru
      _
    // Predicated region
    $region22: #{tpu_custom_call.1} parent=1 // pred_check
      _
    $region23: #{tpu_custom_call.1} parent=1 // pred_check_branch
      %53 = sbr.rel (0) target = $region25
    $region24: #{tpu_custom_call.1} parent=1 // pred_region
      %55 = dma.done [#allocation6], 64
    $region25: #{tpu_custom_call.1} parent=1 // pred_fallthru
      _
    %v56 = vld [vmem:[#allocation2] sm:$0xff]
    %v57 = vld [vmem:[#allocation2 + $0x8] sm:$0xff]
    %v58 = vld [vmem:[#allocation2 + $0x10] sm:$0xff]
    %v59 = vld [vmem:[#allocation2 + $0x18] sm:$0xff]
    %v60 = vld [vmem:[#allocation5] sm:$0xff]
    %v61 = vld [vmem:[#allocation5 + $0x8] sm:$0xff]
    %v62 = vld [vmem:[#allocation5 + $0x10] sm:$0xff]
    %v63 = vld [vmem:[#allocation5 + $0x18] sm:$0xff]
    %v64 = vsub.f32 %v56, %v60
    %v65 = vsub.f32 %v57, %v61
    %v66 = vsub.f32 %v58, %v62
    %v67 = vsub.f32 %v59, %v63
    %v68 = vld [vmem:[#allocation7] sm:$0xf]
    %v70 = vperm.slane %v68, 0
    %v71 = vperm.slane %v68, 1
    %v72 = vperm.slane %v68, 2
    %v73 = vperm.slane %v68, 3
    %v78 = vmul.f32 %v64, %v70
    %v79 = vmul.f32 %v65, %v71
    %v80 = vmul.f32 %v66, %v72
    %v81 = vmul.f32 %v67, %v73
    %v82 = vmul.f32 %v78, %v78
    %v83 = vmul.f32 %v79, %v79
    %v84 = vmul.f32 %v80, %v80
    %v85 = vmul.f32 %v81, %v81
    %v86 = vadd.f32 %v82, %v83
    %v87 = vadd.f32 %v86, %v84
    %v88 = vadd.f32 %v87, %v85
    %89 = vadd.xlane.f32.xlu0 %v88
    %v90 = vpop.xlane.xlu0 %89
    %v91 = vrot.slane %v90, 4
    %v92 = vadd.f32 %v90, %v91
    %v93 = vrot.slane %v92, 2
    %v94 = vadd.f32 %v92, %v93
    %v95 = vrot.slane %v94, 1
    %v96 = vadd.f32 %v94, %v95
    %s97 = vtos %v96
    %v98 = vstv %s97
    %99 = vst [vmem:[#allocation8] sm:$0x1] %v98
    // Predicated region
    $region26: #{tpu_custom_call.1} parent=1 // pred_check
      _
    $region27: #{tpu_custom_call.1} parent=1 // pred_check_branch
      %101 = sbr.rel (0) target = $region29
    $region28: #{tpu_custom_call.1} parent=1 // pred_region
      %103 = vsyncadd [#allocation4], 0
      %s105 = sshll.u32 [#allocation8], 4
      %s106 = int_to_ptr.vmem [resolvable:$true] %s105
      %s107 = sshll.u32 %s3, 4
      %s108 = int_to_ptr.hbm [resolvable:$true] %s107
      %110 = dma.vmem_to_hbm [thread:$0]  %s106, 16, %s108, [#allocation4]
    $region29: #{tpu_custom_call.1} parent=1 // pred_fallthru
      _
    // Predicated region
    $region30: #{tpu_custom_call.1} parent=1 // pred_check
      _
    $region31: #{tpu_custom_call.1} parent=1 // pred_check_branch
      %112 = sbr.rel (0) target = $region33
    $region32: #{tpu_custom_call.1} parent=1 // pred_region
      %114 = dma.done [#allocation4], 16
    $region33: #{tpu_custom_call.1} parent=1 // pred_fallthru
      _
    %115 = vsyncpa [#allocation3], 1
    %116 = vsyncpa [#allocation6], 1
    %117 = vsyncpa [#allocation4], 1

</llo_original>
